<compile_context>
chip_gen: v6e
topology: v6e:2x2x1
jax: 0.10.0
libtpu: 0.0.40
codegen_flags: <defaults>
</compile_context>

<pallas_src>
import functools
import numbers

import jax
import jax.numpy as jnp
from jax.experimental import pallas as pl
from jax.experimental.pallas import tpu as pltpu

_GRAY_W = (0.2989, 0.587, 0.114)  # torchvision rgb_to_grayscale weights


# ---------------------------------------------------------------------------
# Reciprocal strategies: exact divide for the pure-JAX reference, EUP
# approximate reciprocal inside the kernel (frees VALU slots in the hue path).
# ---------------------------------------------------------------------------
def _recip_exact(x):
    return 1.0 / x


def _recip_approx(x):
    return pl.reciprocal(x, approx=True)


def _gray(r, g, b):
    return _GRAY_W[0] * r + _GRAY_W[1] * g + _GRAY_W[2] * b


# ---------------------------------------------------------------------------
# Color ops on planar channels r, g, b of shape (B, Ph, Pw), f32 in [0, 1].
# ---------------------------------------------------------------------------
def _adjust_brightness(r, g, b, f, recip):
    del recip
    return (jnp.clip(r * f, 0.0, 1.0),
            jnp.clip(g * f, 0.0, 1.0),
            jnp.clip(b * f, 0.0, 1.0))


def _adjust_contrast(r, g, b, f, recip):
    del recip
    # per-image (axis 0 = in-block batch) mean of the grayscale image
    mean = jnp.mean(_gray(r, g, b), axis=(1, 2), keepdims=True)
    off = (1.0 - f) * mean
    return (jnp.clip(f * r + off, 0.0, 1.0),
            jnp.clip(f * g + off, 0.0, 1.0),
            jnp.clip(f * b + off, 0.0, 1.0))


def _adjust_saturation(r, g, b, f, recip):
    del recip
    gray = _gray(r, g, b)
    off = (1.0 - f) * gray
    return (jnp.clip(f * r + off, 0.0, 1.0),
            jnp.clip(f * g + off, 0.0, 1.0),
            jnp.clip(f * b + off, 0.0, 1.0))


def _adjust_hue(r, g, b, f, recip):
    # rgb -> hsv (torchvision _rgb2hsv), planar channels
    maxc = jnp.maximum(jnp.maximum(r, g), b)
    minc = jnp.minimum(jnp.minimum(r, g), b)
    eqc = maxc == minc
    cr = maxc - minc
    ones = jnp.ones_like(maxc)
    s = cr * recip(jnp.where(eqc, ones, maxc))
    inv_cr = recip(jnp.where(eqc, ones, cr))
    rc = (maxc - r) * inv_cr
    gc = (maxc - g) * inv_cr
    bc = (maxc - b) * inv_cr
    hr = jnp.where(maxc == r, bc - gc, 0.0)
    hg = jnp.where((maxc == g) & (maxc != r), 2.0 + rc - bc, 0.0)
    hb = jnp.where((maxc != g) & (maxc != r), 4.0 + gc - rc, 0.0)
    h = jnp.mod((hr + hg + hb) / 6.0 + 1.0, 1.0)
    # shift hue
    h = jnp.mod(h + f, 1.0)
    v = maxc
    # hsv -> rgb (torchvision _hsv2rgb)
    h6 = h * 6.0
    i = jnp.floor(h6)
    frac = h6 - i
    # cheap wrap (replaces jnp.mod(i, 6)); guards the h6 == 6.0 rounding edge
    i = jnp.where(i == 6.0, 0.0, i)
    p = jnp.clip(v * (1.0 - s), 0.0, 1.0)
    q = jnp.clip(v * (1.0 - s * frac), 0.0, 1.0)
    t = jnp.clip(v * (1.0 - s * (1.0 - frac)), 0.0, 1.0)

    # hoisted sextant masks, shared by all three output channels
    m0, m1, m2, m3, m4 = (i == 0.0), (i == 1.0), (i == 2.0), (i == 3.0), (i == 4.0)

    def sel(c0, c1, c2, c3, c4, c5):
        out = jnp.where(m0, c0, c5)
        out = jnp.where(m1, c1, out)
        out = jnp.where(m2, c2, out)
        out = jnp.where(m3, c3, out)
        out = jnp.where(m4, c4, out)
        return out

    r_o = sel(v, q, p, p, t, v)
    g_o = sel(t, v, v, q, p, p)
    b_o = sel(p, p, t, v, v, q)
    return r_o, g_o, b_o


_OPS = (_adjust_brightness, _adjust_contrast, _adjust_saturation, _adjust_hue)


# ---------------------------------------------------------------------------
# Pallas kernel: B images per grid step, planar channel math.
# ---------------------------------------------------------------------------
def _color_jitter_kernel(factors_ref, img_ref, out_ref, *, op_order):
    # factors_ref: SMEM (4,) f32 [brightness, contrast, saturation, hue]
    # img_ref/out_ref: VMEM (B, 3, Ph, Pw)
    x = img_ref[...].astype(jnp.float32)
    r, g, b = x[:, 0], x[:, 1], x[:, 2]          # dense (B, Ph, Pw) channel planes
    for fn_id in op_order:                       # op order baked at trace time
        f = factors_ref[fn_id]
        r, g, b = _OPS[fn_id](r, g, b, f, _recip_approx)
    # stack along the outer channel axis (no lane/sublane relayout), one store
    out_ref[...] = jnp.stack([r, g, b], axis=1).astype(out_ref.dtype)


def _pick_block_batch(n, max_b):
    """Largest divisor of n that fits the budget while keeping >= 2 grid steps."""
    target = max(1, min(max_b, n // 2 if n > 1 else 1))
    for cand in range(target, 0, -1):
        if n % cand == 0:
            return cand
    return 1


def color_jitter_pallas(img, factors, op_order, *,
                        block_bytes_budget=2 * 1024 * 1024,
                        vmem_limit_bytes=48 * 1024 * 1024):
    """img: (N, 3, H, W) float in [0,1]; factors: (4,) f32; op_order: ints."""
    N, C, H, W = img.shape
    assert C == 3, "ColorJitter hue/saturation require 3-channel RGB input"
    op_order = tuple(int(i) for i in op_order)
    if not op_order:            # all jitter params disabled -> identity
        return img

    # Lane-dense plane layout: (H, W) -> (H*W // 128, 128) when possible.
    P = H * W
    if P % 128 == 0:
        ph, pw = P // 128, 128
    else:
        ph, pw = H, W  # TODO(synk): pad W to a multiple of 128 for lane-dense stores
    x = img.reshape(N, C, ph, pw)

    bytes_per_image = C * P * x.dtype.itemsize
    max_b = max(1, block_bytes_budget // bytes_per_image)
    B = _pick_block_batch(N, max_b)
    # TODO(synk): images larger than the block budget would need pixel-axis tiling
    # with a two-phase contrast mean (whole-image reduction); not implemented.

    kernel = functools.partial(_color_jitter_kernel, op_order=op_order)
    out = pl.pallas_call(
        kernel,
        out_shape=jax.ShapeDtypeStruct((N, C, ph, pw), img.dtype),
        grid=(N // B,),
        in_specs=[
            pl.BlockSpec(memory_space=pltpu.MemorySpace.SMEM),        # factors
            pl.BlockSpec((B, C, ph, pw), lambda n: (n, 0, 0, 0)),     # images
        ],
        out_specs=pl.BlockSpec((B, C, ph, pw), lambda n: (n, 0, 0, 0)),
        compiler_params=pltpu.CompilerParams(
            dimension_semantics=("parallel",),
            vmem_limit_bytes=vmem_limit_bytes,
        ),
    )(factors.astype(jnp.float32), x)
    return out.reshape(N, C, H, W)


# ---------------------------------------------------------------------------
# Module-like wrapper mirroring ColorJitter.__init__ / forward semantics.
# ---------------------------------------------------------------------------
class ColorJitterPallas:
    def __init__(self, brightness=0, contrast=0, saturation=0, hue=0):
        self.brightness = self._check_input(brightness, "brightness")
        self.contrast = self._check_input(contrast, "contrast")
        self.saturation = self._check_input(saturation, "saturation")
        self.hue = self._check_input(
            hue, "hue", center=0, bound=(-0.5, 0.5), clip_first_on_zero=False
        )

    @staticmethod
    def _check_input(value, name, center=1, bound=(0, float("inf")),
                     clip_first_on_zero=True):
        if isinstance(value, numbers.Number):
            if value < 0:
                raise ValueError(f"If {name} is a single number, it must be non negative.")
            value = [center - float(value), center + float(value)]
            if clip_first_on_zero:
                value[0] = max(value[0], 0.0)
        elif isinstance(value, (tuple, list)) and len(value) == 2:
            if not bound[0] <= value[0] <= value[1] <= bound[1]:
                raise ValueError(f"{name} values should be between {bound}")
        else:
            raise TypeError(f"{name} should be a single number or a list/tuple with length 2.")
        if value[0] == value[1] == center:
            value = None
        return value

    def sample_params(self, key):
        """Deterministically sample op order + factors (the randomness of forward)."""
        k_perm, k_b, k_c, k_s, k_h = jax.random.split(key, 5)
        perm = [int(v) for v in jax.random.permutation(k_perm, 4)]
        cfgs = [self.brightness, self.contrast, self.saturation, self.hue]
        keys = [k_b, k_c, k_s, k_h]
        defaults = [1.0, 1.0, 1.0, 0.0]
        factors = []
        for cfg, kf, d in zip(cfgs, keys, defaults):
            if cfg is None:
                factors.append(jnp.float32(d))
            else:
                factors.append(jax.random.uniform(kf, (), jnp.float32, cfg[0], cfg[1]))
        op_order = tuple(fn for fn in perm if cfgs[fn] is not None)
        return jnp.stack(factors), op_order

    def __call__(self, img, key):
        factors, op_order = self.sample_params(key)
        return color_jitter_pallas(img, factors, op_order)


# ---------------------------------------------------------------------------
# Pure-JAX reference (same math, exact divides) for correctness checks.
# ---------------------------------------------------------------------------
def _reference(img, factors, op_order):
    x = img.astype(jnp.float32)
    r, g, b = x[:, 0], x[:, 1], x[:, 2]
    for fn_id in op_order:
        r, g, b = _OPS[int(fn_id)](r, g, b, factors[int(fn_id)], _recip_exact)
    return jnp.stack([r, g, b], axis=1).astype(img.dtype)


if __name__ == "__main__":
    key = jax.random.PRNGKey(0)
    k_img, k_fwd = jax.random.split(key)

    # NCHW RGB image batch in [0, 1]
    img = jax.random.uniform(k_img, (2, 3, 16, 16), dtype=jnp.float32)

    # 1) full jitter (brightness/contrast/saturation/hue in random order)
    cj = ColorJitterPallas(brightness=0.4, contrast=0.4, saturation=0.4, hue=0.1)
    factors, op_order = cj.sample_params(k_fwd)
    out = jax.block_until_ready(color_jitter_pallas(img, factors, op_order))
    ref = _reference(img, factors, op_order)
    assert out.shape == img.shape and out.dtype == img.dtype
    # hue path uses the EUP approximate reciprocal -> tiny diff vs exact-divide ref
    assert bool(jnp.allclose(out, ref, atol=2e-2)), "mismatch vs reference (with hue)"

    # 2) hue disabled: all ops are exact, check tightly
    cj2 = ColorJitterPallas(brightness=0.4, contrast=0.4, saturation=0.4, hue=0)
    factors2, op_order2 = cj2.sample_params(k_fwd)
    out2 = jax.block_until_ready(color_jitter_pallas(img, factors2, op_order2))
    ref2 = _reference(img, factors2, op_order2)
    assert bool(jnp.allclose(out2, ref2, atol=1e-5, rtol=1e-5)), "mismatch vs reference (no hue)"

    print("KERNEL_OK")
</pallas_src>

<mosaic_0001>
module attributes {stable_mosaic.version = 11 : i64} {
  func.func @_color_jitter_kernel(%arg0: i32, %arg1: memref<4xf32, #tpu.memory_space<smem>>, %arg2: memref<1x3x2x128xf32, #tpu.memory_space<vmem>>, %arg3: memref<1x3x2x128xf32, #tpu.memory_space<vmem>>) attributes {dimension_semantics = [#tpu.dimension_semantics<parallel>], iteration_bounds = array<i64: 2>, scalar_prefetch = 0 : i64, scratch_operands = 0 : i64, tpu.core_type = #tpu.core_type<tc>, window_params = [{transform_indices = @transform_0, window_bounds = array<i64: 4>}, {transform_indices = @transform_1, window_bounds = array<i64: 1, 3, 2, 128>}, {transform_indices = @transform_2, window_bounds = array<i64: 1, 3, 2, 128>}]} {
    %c0 = arith.constant 0 : index
    %c0_0 = arith.constant 0 : index
    %c0_1 = arith.constant 0 : index
    %c0_2 = arith.constant 0 : index
    %0 = vector.load %arg2[%c0, %c0_0, %c0_1, %c0_2] : memref<1x3x2x128xf32, #tpu.memory_space<vmem>>, vector<1x3x2x128xf32>
    %1 = vector.extract_strided_slice %0 {offsets = [0, 0, 0, 0], sizes = [1, 1, 2, 128], strides = [1, 1, 1, 1]} : vector<1x3x2x128xf32> to vector<1x1x2x128xf32>
    %2 = vector.shape_cast %1 : vector<1x1x2x128xf32> to vector<1x2x128xf32>
    %3 = vector.extract_strided_slice %0 {offsets = [0, 1, 0, 0], sizes = [1, 1, 2, 128], strides = [1, 1, 1, 1]} : vector<1x3x2x128xf32> to vector<1x1x2x128xf32>
    %4 = vector.shape_cast %3 : vector<1x1x2x128xf32> to vector<1x2x128xf32>
    %5 = vector.extract_strided_slice %0 {offsets = [0, 2, 0, 0], sizes = [1, 1, 2, 128], strides = [1, 1, 1, 1]} : vector<1x3x2x128xf32> to vector<1x1x2x128xf32>
    %6 = vector.shape_cast %5 : vector<1x1x2x128xf32> to vector<1x2x128xf32>
    %c3 = arith.constant 3 : index
    %7 = memref.load %arg1[%c3] : memref<4xf32, #tpu.memory_space<smem>>
    %8 = arith.maximumf %2, %4 : vector<1x2x128xf32>
    %9 = arith.maximumf %8, %6 : vector<1x2x128xf32>
    %10 = arith.minimumf %2, %4 : vector<1x2x128xf32>
    %11 = arith.minimumf %10, %6 : vector<1x2x128xf32>
    %12 = arith.cmpf oeq, %9, %11 : vector<1x2x128xf32>
    %13 = arith.subf %9, %11 : vector<1x2x128xf32>
    %cst = arith.constant 1.000000e+00 : f32
    %14 = vector.broadcast %cst : f32 to vector<1x2x128xf32>
    %15 = arith.select %12, %14, %9 : vector<1x2x128xi1>, vector<1x2x128xf32>
    %16 = tpu.reciprocal %15 {approx = true} : vector<1x2x128xf32> -> vector<1x2x128xf32>
    %17 = arith.mulf %13, %16 : vector<1x2x128xf32>
    %18 = arith.select %12, %14, %13 : vector<1x2x128xi1>, vector<1x2x128xf32>
    %19 = tpu.reciprocal %18 {approx = true} : vector<1x2x128xf32> -> vector<1x2x128xf32>
    %20 = arith.subf %9, %2 : vector<1x2x128xf32>
    %21 = arith.mulf %20, %19 : vector<1x2x128xf32>
    %22 = arith.subf %9, %4 : vector<1x2x128xf32>
    %23 = arith.mulf %22, %19 : vector<1x2x128xf32>
    %24 = arith.subf %9, %6 : vector<1x2x128xf32>
    %25 = arith.mulf %24, %19 : vector<1x2x128xf32>
    %26 = arith.cmpf oeq, %9, %2 : vector<1x2x128xf32>
    %27 = arith.subf %25, %23 : vector<1x2x128xf32>
    %cst_3 = arith.constant 0.000000e+00 : f32
    %28 = vector.broadcast %cst_3 : f32 to vector<1x2x128xf32>
    %29 = arith.select %26, %27, %28 : vector<1x2x128xi1>, vector<1x2x128xf32>
    %30 = arith.cmpf oeq, %9, %4 : vector<1x2x128xf32>
    %31 = arith.cmpf one, %9, %2 : vector<1x2x128xf32>
    %32 = arith.andi %30, %31 : vector<1x2x128xi1>
    %cst_4 = arith.constant 2.000000e+00 : f32
    %33 = vector.broadcast %cst_4 : f32 to vector<1x2x128xf32>
    %34 = arith.addf %33, %21 : vector<1x2x128xf32>
    %35 = arith.subf %34, %25 : vector<1x2x128xf32>
    %cst_5 = arith.constant 0.000000e+00 : f32
    %36 = vector.broadcast %cst_5 : f32 to vector<1x2x128xf32>
    %37 = arith.select %32, %35, %36 : vector<1x2x128xi1>, vector<1x2x128xf32>
    %38 = arith.cmpf one, %9, %4 : vector<1x2x128xf32>
    %39 = arith.cmpf one, %9, %2 : vector<1x2x128xf32>
    %40 = arith.andi %38, %39 : vector<1x2x128xi1>
    %cst_6 = arith.constant 4.000000e+00 : f32
    %41 = vector.broadcast %cst_6 : f32 to vector<1x2x128xf32>
    %42 = arith.addf %41, %23 : vector<1x2x128xf32>
    %43 = arith.subf %42, %21 : vector<1x2x128xf32>
    %cst_7 = arith.constant 0.000000e+00 : f32
    %44 = vector.broadcast %cst_7 : f32 to vector<1x2x128xf32>
    %45 = arith.select %40, %43, %44 : vector<1x2x128xi1>, vector<1x2x128xf32>
    %46 = arith.addf %29, %37 : vector<1x2x128xf32>
    %47 = arith.addf %46, %45 : vector<1x2x128xf32>
    %cst_8 = arith.constant 6.000000e+00 : f32
    %48 = vector.broadcast %cst_8 : f32 to vector<1x2x128xf32>
    %49 = arith.divf %47, %48 : vector<1x2x128xf32>
    %cst_9 = arith.constant 1.000000e+00 : f32
    %50 = vector.broadcast %cst_9 : f32 to vector<1x2x128xf32>
    %51 = arith.addf %49, %50 : vector<1x2x128xf32>
    %cst_10 = arith.constant 1.000000e+00 : f32
    %52 = vector.broadcast %cst_10 : f32 to vector<1x2x128xf32>
    %53 = arith.remf %51, %52 : vector<1x2x128xf32>
    %cst_11 = arith.constant 0.000000e+00 : f32
    %54 = vector.broadcast %cst_11 : f32 to vector<1x2x128xf32>
    %55 = arith.cmpf one, %53, %54 : vector<1x2x128xf32>
    %cst_12 = arith.constant 0.000000e+00 : f32
    %56 = vector.broadcast %cst_12 : f32 to vector<1x2x128xf32>
    %57 = arith.cmpf olt, %53, %56 : vector<1x2x128xf32>
    %cst_13 = arith.constant 0.000000e+00 : f32
    %58 = arith.cmpf olt, %cst_10, %cst_13 : f32
    %59 = vector.broadcast %58 : i1 to vector<1x2x128xi1>
    %60 = vector.broadcast %59 : vector<1x2x128xi1> to vector<1x2x128xi1>
    %61 = arith.xori %57, %60 : vector<1x2x128xi1>
    %62 = arith.andi %61, %55 : vector<1x2x128xi1>
    %63 = vector.broadcast %cst_10 : f32 to vector<1x2x128xf32>
    %64 = arith.addf %53, %63 : vector<1x2x128xf32>
    %65 = arith.select %62, %64, %53 : vector<1x2x128xi1>, vector<1x2x128xf32>
    %66 = vector.broadcast %7 : f32 to vector<1x2x128xf32>
    %67 = arith.addf %65, %66 : vector<1x2x128xf32>
    %cst_14 = arith.constant 1.000000e+00 : f32
    %68 = vector.broadcast %cst_14 : f32 to vector<1x2x128xf32>
    %69 = arith.remf %67, %68 : vector<1x2x128xf32>
    %cst_15 = arith.constant 0.000000e+00 : f32
    %70 = vector.broadcast %cst_15 : f32 to vector<1x2x128xf32>
    %71 = arith.cmpf one, %69, %70 : vector<1x2x128xf32>
    %cst_16 = arith.constant 0.000000e+00 : f32
    %72 = vector.broadcast %cst_16 : f32 to vector<1x2x128xf32>
    %73 = arith.cmpf olt, %69, %72 : vector<1x2x128xf32>
    %cst_17 = arith.constant 0.000000e+00 : f32
    %74 = arith.cmpf olt, %cst_14, %cst_17 : f32
    %75 = vector.broadcast %74 : i1 to vector<1x2x128xi1>
    %76 = vector.broadcast %75 : vector<1x2x128xi1> to vector<1x2x128xi1>
    %77 = arith.xori %73, %76 : vector<1x2x128xi1>
    %78 = arith.andi %77, %71 : vector<1x2x128xi1>
    %79 = vector.broadcast %cst_14 : f32 to vector<1x2x128xf32>
    %80 = arith.addf %69, %79 : vector<1x2x128xf32>
    %81 = arith.select %78, %80, %69 : vector<1x2x128xi1>, vector<1x2x128xf32>
    %cst_18 = arith.constant 6.000000e+00 : f32
    %82 = vector.broadcast %cst_18 : f32 to vector<1x2x128xf32>
    %83 = arith.mulf %81, %82 : vector<1x2x128xf32>
    %84 = math.floor %83 : vector<1x2x128xf32>
    %85 = arith.subf %83, %84 : vector<1x2x128xf32>
    %cst_19 = arith.constant 6.000000e+00 : f32
    %86 = vector.broadcast %cst_19 : f32 to vector<1x2x128xf32>
    %87 = arith.cmpf oeq, %84, %86 : vector<1x2x128xf32>
    %cst_20 = arith.constant 0.000000e+00 : f32
    %88 = vector.broadcast %cst_20 : f32 to vector<1x2x128xf32>
    %89 = arith.select %87, %88, %84 : vector<1x2x128xi1>, vector<1x2x128xf32>
    %cst_21 = arith.constant 1.000000e+00 : f32
    %90 = vector.broadcast %cst_21 : f32 to vector<1x2x128xf32>
    %91 = arith.subf %90, %17 : vector<1x2x128xf32>
    %92 = arith.mulf %9, %91 : vector<1x2x128xf32>
    %cst_22 = arith.constant 0.000000e+00 : f32
    %cst_23 = arith.constant 1.000000e+00 : f32
    %93 = vector.broadcast %cst_22 : f32 to vector<1x2x128xf32>
    %94 = arith.maximumf %93, %92 : vector<1x2x128xf32>
    %95 = vector.broadcast %cst_23 : f32 to vector<1x2x128xf32>
    %96 = arith.minimumf %95, %94 : vector<1x2x128xf32>
    %97 = arith.mulf %17, %85 : vector<1x2x128xf32>
    %cst_24 = arith.constant 1.000000e+00 : f32
    %98 = vector.broadcast %cst_24 : f32 to vector<1x2x128xf32>
    %99 = arith.subf %98, %97 : vector<1x2x128xf32>
    %100 = arith.mulf %9, %99 : vector<1x2x128xf32>
    %cst_25 = arith.constant 0.000000e+00 : f32
    %cst_26 = arith.constant 1.000000e+00 : f32
    %101 = vector.broadcast %cst_25 : f32 to vector<1x2x128xf32>
    %102 = arith.maximumf %101, %100 : vector<1x2x128xf32>
    %103 = vector.broadcast %cst_26 : f32 to vector<1x2x128xf32>
    %104 = arith.minimumf %103, %102 : vector<1x2x128xf32>
    %cst_27 = arith.constant 1.000000e+00 : f32
    %105 = vector.broadcast %cst_27 : f32 to vector<1x2x128xf32>
    %106 = arith.subf %105, %85 : vector<1x2x128xf32>
    %107 = arith.mulf %17, %106 : vector<1x2x128xf32>
    %cst_28 = arith.constant 1.000000e+00 : f32
    %108 = vector.broadcast %cst_28 : f32 to vector<1x2x128xf32>
    %109 = arith.subf %108, %107 : vector<1x2x128xf32>
    %110 = arith.mulf %9, %109 : vector<1x2x128xf32>
    %cst_29 = arith.constant 0.000000e+00 : f32
    %cst_30 = arith.constant 1.000000e+00 : f32
    %111 = vector.broadcast %cst_29 : f32 to vector<1x2x128xf32>
    %112 = arith.maximumf %111, %110 : vector<1x2x128xf32>
    %113 = vector.broadcast %cst_30 : f32 to vector<1x2x128xf32>
    %114 = arith.minimumf %113, %112 : vector<1x2x128xf32>
    %cst_31 = arith.constant 0.000000e+00 : f32
    %115 = vector.broadcast %cst_31 : f32 to vector<1x2x128xf32>
    %116 = arith.cmpf oeq, %89, %115 : vector<1x2x128xf32>
    %cst_32 = arith.constant 1.000000e+00 : f32
    %117 = vector.broadcast %cst_32 : f32 to vector<1x2x128xf32>
    %118 = arith.cmpf oeq, %89, %117 : vector<1x2x128xf32>
    %cst_33 = arith.constant 2.000000e+00 : f32
    %119 = vector.broadcast %cst_33 : f32 to vector<1x2x128xf32>
    %120 = arith.cmpf oeq, %89, %119 : vector<1x2x128xf32>
    %cst_34 = arith.constant 3.000000e+00 : f32
    %121 = vector.broadcast %cst_34 : f32 to vector<1x2x128xf32>
    %122 = arith.cmpf oeq, %89, %121 : vector<1x2x128xf32>
    %cst_35 = arith.constant 4.000000e+00 : f32
    %123 = vector.broadcast %cst_35 : f32 to vector<1x2x128xf32>
    %124 = arith.cmpf oeq, %89, %123 : vector<1x2x128xf32>
    %125 = arith.select %116, %9, %9 : vector<1x2x128xi1>, vector<1x2x128xf32>
    %126 = arith.select %118, %104, %125 : vector<1x2x128xi1>, vector<1x2x128xf32>
    %127 = arith.select %120, %96, %126 : vector<1x2x128xi1>, vector<1x2x128xf32>
    %128 = arith.select %122, %96, %127 : vector<1x2x128xi1>, vector<1x2x128xf32>
    %129 = arith.select %124, %114, %128 : vector<1x2x128xi1>, vector<1x2x128xf32>
    %130 = arith.select %116, %114, %96 : vector<1x2x128xi1>, vector<1x2x128xf32>
    %131 = arith.select %118, %9, %130 : vector<1x2x128xi1>, vector<1x2x128xf32>
    %132 = arith.select %120, %9, %131 : vector<1x2x128xi1>, vector<1x2x128xf32>
    %133 = arith.select %122, %104, %132 : vector<1x2x128xi1>, vector<1x2x128xf32>
    %134 = arith.select %124, %96, %133 : vector<1x2x128xi1>, vector<1x2x128xf32>
    %135 = arith.select %116, %96, %104 : vector<1x2x128xi1>, vector<1x2x128xf32>
    %136 = arith.select %118, %96, %135 : vector<1x2x128xi1>, vector<1x2x128xf32>
    %137 = arith.select %120, %114, %136 : vector<1x2x128xi1>, vector<1x2x128xf32>
    %138 = arith.select %122, %9, %137 : vector<1x2x128xi1>, vector<1x2x128xf32>
    %139 = arith.select %124, %9, %138 : vector<1x2x128xi1>, vector<1x2x128xf32>
    %c1 = arith.constant 1 : index
    %140 = memref.load %arg1[%c1] : memref<4xf32, #tpu.memory_space<smem>>
    %cst_36 = arith.constant 2.989000e-01 : f32
    %141 = vector.broadcast %cst_36 : f32 to vector<1x2x128xf32>
    %142 = arith.mulf %141, %129 : vector<1x2x128xf32>
    %cst_37 = arith.constant 5.870000e-01 : f32
    %143 = vector.broadcast %cst_37 : f32 to vector<1x2x128xf32>
    %144 = arith.mulf %143, %134 : vector<1x2x128xf32>
    %145 = arith.addf %142, %144 : vector<1x2x128xf32>
    %cst_38 = arith.constant 1.140000e-01 : f32
    %146 = vector.broadcast %cst_38 : f32 to vector<1x2x128xf32>
    %147 = arith.mulf %146, %139 : vector<1x2x128xf32>
    %148 = arith.addf %145, %147 : vector<1x2x128xf32>
    %cst_39 = arith.constant dense<0.000000e+00> : vector<1xf32>
    %149 = vector.multi_reduction <add>, %148, %cst_39 [1, 2] : vector<1x2x128xf32> to vector<1xf32>
    %150 = vector.shape_cast %149 : vector<1xf32> to vector<1x1x1xf32>
    %cst_40 = arith.constant 2.560000e+02 : f32
    %151 = vector.broadcast %cst_40 : f32 to vector<1x1x1xf32>
    %152 = arith.divf %150, %151 : vector<1x1x1xf32>
    %cst_41 = arith.constant 1.000000e+00 : f32
    %153 = arith.subf %cst_41, %140 : f32
    %154 = vector.broadcast %153 : f32 to vector<1x1x1xf32>
    %155 = arith.mulf %154, %152 : vector<1x1x1xf32>
    %156 = vector.broadcast %140 : f32 to vector<1x2x128xf32>
    %157 = arith.mulf %156, %129 : vector<1x2x128xf32>
    %158 = vector.broadcast %155 : vector<1x1x1xf32> to vector<1x2x128xf32>
    %159 = arith.addf %157, %158 : vector<1x2x128xf32>
    %cst_42 = arith.constant 0.000000e+00 : f32
    %cst_43 = arith.constant 1.000000e+00 : f32
    %160 = vector.broadcast %cst_42 : f32 to vector<1x2x128xf32>
    %161 = arith.maximumf %160, %159 : vector<1x2x128xf32>
    %162 = vector.broadcast %cst_43 : f32 to vector<1x2x128xf32>
    %163 = arith.minimumf %162, %161 : vector<1x2x128xf32>
    %164 = vector.broadcast %140 : f32 to vector<1x2x128xf32>
    %165 = arith.mulf %164, %134 : vector<1x2x128xf32>
    %166 = vector.broadcast %155 : vector<1x1x1xf32> to vector<1x2x128xf32>
    %167 = arith.addf %165, %166 : vector<1x2x128xf32>
    %cst_44 = arith.constant 0.000000e+00 : f32
    %cst_45 = arith.constant 1.000000e+00 : f32
    %168 = vector.broadcast %cst_44 : f32 to vector<1x2x128xf32>
    %169 = arith.maximumf %168, %167 : vector<1x2x128xf32>
    %170 = vector.broadcast %cst_45 : f32 to vector<1x2x128xf32>
    %171 = arith.minimumf %170, %169 : vector<1x2x128xf32>
    %172 = vector.broadcast %140 : f32 to vector<1x2x128xf32>
    %173 = arith.mulf %172, %139 : vector<1x2x128xf32>
    %174 = vector.broadcast %155 : vector<1x1x1xf32> to vector<1x2x128xf32>
    %175 = arith.addf %173, %174 : vector<1x2x128xf32>
    %cst_46 = arith.constant 0.000000e+00 : f32
    %cst_47 = arith.constant 1.000000e+00 : f32
    %176 = vector.broadcast %cst_46 : f32 to vector<1x2x128xf32>
    %177 = arith.maximumf %176, %175 : vector<1x2x128xf32>
    %178 = vector.broadcast %cst_47 : f32 to vector<1x2x128xf32>
    %179 = arith.minimumf %178, %177 : vector<1x2x128xf32>
    %c0_48 = arith.constant 0 : index
    %180 = memref.load %arg1[%c0_48] : memref<4xf32, #tpu.memory_space<smem>>
    %181 = vector.broadcast %180 : f32 to vector<1x2x128xf32>
    %182 = arith.mulf %163, %181 : vector<1x2x128xf32>
    %cst_49 = arith.constant 0.000000e+00 : f32
    %cst_50 = arith.constant 1.000000e+00 : f32
    %183 = vector.broadcast %cst_49 : f32 to vector<1x2x128xf32>
    %184 = arith.maximumf %183, %182 : vector<1x2x128xf32>
    %185 = vector.broadcast %cst_50 : f32 to vector<1x2x128xf32>
    %186 = arith.minimumf %185, %184 : vector<1x2x128xf32>
    %187 = vector.broadcast %180 : f32 to vector<1x2x128xf32>
    %188 = arith.mulf %171, %187 : vector<1x2x128xf32>
    %cst_51 = arith.constant 0.000000e+00 : f32
    %cst_52 = arith.constant 1.000000e+00 : f32
    %189 = vector.broadcast %cst_51 : f32 to vector<1x2x128xf32>
    %190 = arith.maximumf %189, %188 : vector<1x2x128xf32>
    %191 = vector.broadcast %cst_52 : f32 to vector<1x2x128xf32>
    %192 = arith.minimumf %191, %190 : vector<1x2x128xf32>
    %193 = vector.broadcast %180 : f32 to vector<1x2x128xf32>
    %194 = arith.mulf %179, %193 : vector<1x2x128xf32>
    %cst_53 = arith.constant 0.000000e+00 : f32
    %cst_54 = arith.constant 1.000000e+00 : f32
    %195 = vector.broadcast %cst_53 : f32 to vector<1x2x128xf32>
    %196 = arith.maximumf %195, %194 : vector<1x2x128xf32>
    %197 = vector.broadcast %cst_54 : f32 to vector<1x2x128xf32>
    %198 = arith.minimumf %197, %196 : vector<1x2x128xf32>
    %c2 = arith.constant 2 : index
    %199 = memref.load %arg1[%c2] : memref<4xf32, #tpu.memory_space<smem>>
    %cst_55 = arith.constant 2.989000e-01 : f32
    %200 = vector.broadcast %cst_55 : f32 to vector<1x2x128xf32>
    %201 = arith.mulf %200, %186 : vector<1x2x128xf32>
    %cst_56 = arith.constant 5.870000e-01 : f32
    %202 = vector.broadcast %cst_56 : f32 to vector<1x2x128xf32>
    %203 = arith.mulf %202, %192 : vector<1x2x128xf32>
    %204 = arith.addf %201, %203 : vector<1x2x128xf32>
    %cst_57 = arith.constant 1.140000e-01 : f32
    %205 = vector.broadcast %cst_57 : f32 to vector<1x2x128xf32>
    %206 = arith.mulf %205, %198 : vector<1x2x128xf32>
    %207 = arith.addf %204, %206 : vector<1x2x128xf32>
    %cst_58 = arith.constant 1.000000e+00 : f32
    %208 = arith.subf %cst_58, %199 : f32
    %209 = vector.broadcast %208 : f32 to vector<1x2x128xf32>
    %210 = arith.mulf %209, %207 : vector<1x2x128xf32>
    %211 = vector.broadcast %199 : f32 to vector<1x2x128xf32>
    %212 = arith.mulf %211, %186 : vector<1x2x128xf32>
    %213 = arith.addf %212, %210 : vector<1x2x128xf32>
    %cst_59 = arith.constant 0.000000e+00 : f32
    %cst_60 = arith.constant 1.000000e+00 : f32
    %214 = vector.broadcast %cst_59 : f32 to vector<1x2x128xf32>
    %215 = arith.maximumf %214, %213 : vector<1x2x128xf32>
    %216 = vector.broadcast %cst_60 : f32 to vector<1x2x128xf32>
    %217 = arith.minimumf %216, %215 : vector<1x2x128xf32>
    %218 = vector.broadcast %199 : f32 to vector<1x2x128xf32>
    %219 = arith.mulf %218, %192 : vector<1x2x128xf32>
    %220 = arith.addf %219, %210 : vector<1x2x128xf32>
    %cst_61 = arith.constant 0.000000e+00 : f32
    %cst_62 = arith.constant 1.000000e+00 : f32
    %221 = vector.broadcast %cst_61 : f32 to vector<1x2x128xf32>
    %222 = arith.maximumf %221, %220 : vector<1x2x128xf32>
    %223 = vector.broadcast %cst_62 : f32 to vector<1x2x128xf32>
    %224 = arith.minimumf %223, %222 : vector<1x2x128xf32>
    %225 = vector.broadcast %199 : f32 to vector<1x2x128xf32>
    %226 = arith.mulf %225, %198 : vector<1x2x128xf32>
    %227 = arith.addf %226, %210 : vector<1x2x128xf32>
    %cst_63 = arith.constant 0.000000e+00 : f32
    %cst_64 = arith.constant 1.000000e+00 : f32
    %228 = vector.broadcast %cst_63 : f32 to vector<1x2x128xf32>
    %229 = arith.maximumf %228, %227 : vector<1x2x128xf32>
    %230 = vector.broadcast %cst_64 : f32 to vector<1x2x128xf32>
    %231 = arith.minimumf %230, %229 : vector<1x2x128xf32>
    %232 = vector.shape_cast %217 : vector<1x2x128xf32> to vector<1x1x2x128xf32>
    %233 = vector.shape_cast %224 : vector<1x2x128xf32> to vector<1x1x2x128xf32>
    %234 = vector.shape_cast %231 : vector<1x2x128xf32> to vector<1x1x2x128xf32>
    %235 = tpu.concatenate %232, %233, %234 in 1 : vector<1x1x2x128xf32>, vector<1x1x2x128xf32>, vector<1x1x2x128xf32> -> vector<1x3x2x128xf32>
    %c0_65 = arith.constant 0 : index
    %c0_66 = arith.constant 0 : index
    %c0_67 = arith.constant 0 : index
    %c0_68 = arith.constant 0 : index
    %236 = vector.load %arg3[%c0_65, %c0_66, %c0_67, %c0_68] : memref<1x3x2x128xf32, #tpu.memory_space<vmem>>, vector<1x3x2x128xf32>
    tpu.vector_store %arg3[%c0_65, %c0_66, %c0_67, %c0_68], %235 {strides = array<i32>} : memref<1x3x2x128xf32, #tpu.memory_space<vmem>>, vector<1x3x2x128xf32>,
    return
  }
  func.func @transform_0(%arg0: i32) -> i32 {
    %c0_i32 = arith.constant 0 : i32
    %c0_i32_0 = arith.constant 0 : i32
    return %c0_i32 : i32
  }
  func.func @transform_1(%arg0: i32) -> (i32, i32, i32, i32) {
    %c0_i32 = arith.constant 0 : i32
    %c0_i32_0 = arith.constant 0 : i32
    %c0_i32_1 = arith.constant 0 : i32
    %c0_i32_2 = arith.constant 0 : i32
    return %arg0, %c0_i32, %c0_i32_0, %c0_i32_1 : i32, i32, i32, i32
  }
  func.func @transform_2(%arg0: i32) -> (i32, i32, i32, i32) {
    %c0_i32 = arith.constant 0 : i32
    %c0_i32_0 = arith.constant 0 : i32
    %c0_i32_1 = arith.constant 0 : i32
    %c0_i32_2 = arith.constant 0 : i32
    return %arg0, %c0_i32, %c0_i32_0, %c0_i32_1 : i32, i32, i32, i32
  }
}

</mosaic_0001>

<llo_original>
// kernel: tpu_custom_call.1
$region0: #{tpu_custom_call.1}
  #allocation0 [shape = 'u32[]', space=smem, size = 0x4, offset = 0x4, fixed_abs, tag = 'smem constant byte address 0x4 - core index']
  #allocation1 [shape = 'u32[144,128]{1,0:T(1,128)}', space=vmem, size = 0x12000, scoped, tag = 'internal scratch']
  %s0 = inlined_call_operand.hbm [shape: f32[4], index: 0, kind: input, shape index: {}]
  %s1 = inlined_call_operand.hbm [shape: f32[2,3,2,128], index: 1, kind: input, shape index: {}]
  %s2 = inlined_call_operand.hbm [shape: f32[2,3,2,128], index: 2, kind: output, shape index: {}]
  %s3 = sld [smem:[#allocation0]]
  $region49: #{tpu_custom_call.1} parent=0
    _
  %s5 = ssub.s32 1, %s3
  %s6 = scalar_select 0, %s5, %s3
  $region1: #{tpu_custom_call.1} parent=0
    #allocation2 [shape = 'u8[512]{0}', space=smem, size = 0x200, scoped, tag = 'input window, operand 0, single buffered']
    #allocation3 [shape = 's32[2]{0}', space=sflag, size = 0x8, scoped, tag = 'scoped memory for tpu_custom_call.1']
    #allocation4 [shape = 's32[2]{0}', space=sflag, size = 0x8, scoped, tag = 'scoped memory for tpu_custom_call.1']
    #allocation5 [shape = 's32[2]{0}', space=sflag, size = 0x8, scoped, tag = 'scoped memory for tpu_custom_call.1']
    #allocation6 [shape = 'u8[6144]{0}', space=vmem, size = 0x1800, scoped, tag = 'input window, operand 1']
    #allocation7 [shape = 'u8[6144]{0}', space=vmem, size = 0x1800, scoped, tag = 'output window, operand 0']
    %7 = vsyncpa [#allocation5], 0
    %8 = vsyncpa [#allocation3], 0
    %s9 = scalar_lea.sflag [#allocation3], 1
    %10 = vsyncpa %s9, 0
    %11 = vsyncpa [#allocation4], 0
    %s12 = scalar_lea.sflag [#allocation4], 1
    %13 = vsyncpa %s12, 0
    loop: start=0, step=1, limit=4
    $region2: #{tpu_custom_call.1} parent=1 // loop_pre_header
      _
    $region3: #{tpu_custom_call.1} parent=1 // loop_header
      %s15 = sphi 0, %s19
      %p16 = scmp.ge.s32.totalorder %s15, 4
      %s23 = sphi 0, %s23
      %s25 = sphi 0, %s23
      %s26 = sphi 0, %s25
      %s40 = sphi 0, %s26
      %s46 = sphi 0, %s48
      %s49 = sphi 0, %s46
      %s50 = sphi 0, %s49
      %s66 = sphi 0, %s50
      %s72 = sphi 0, %s74
      %s75 = sphi 0, %s72
      %s76 = sphi 0, %s75
      %s92 = sphi 0, %s76
    $region4: #{tpu_custom_call.1} parent=1 // loop_header_branch
      %18 = sbr.rel (%p16) target = $region8
    $region5: #{tpu_custom_call.1} parent=1 // loop_body
      %s20 = ssub.s32 %s15, 1
      %s21 = ssub.s32 %s15, 2
      %s22 = sadd.s32 %s15, 1
      %s24 = sadd.s32 %s23, 1
      %p27 = scmp.eq.s32.totalorder %s15, 1
      %p28 = scmp.ne.s32.totalorder %s23, %s25
      %p29 = scmp.eq.s32.totalorder %s15, 0
      %p30 = por %p28, %p29
      %p31 = scmp.ne.s32.totalorder %s23, %s25
      %p32 = scmp.eq.s32.totalorder %s20, 1
      %p33 = por %p31, %p32
      %p34 = scmp.ne.s32.totalorder %s25, %s26
      %p35 = scmp.eq.s32.totalorder %s20, 0
      %p36 = por %p34, %p35
      %p37 = scmp.ne.s32.totalorder %s25, %s26
      %p38 = scmp.eq.s32.totalorder %s21, 1
      %p39 = por %p37, %p38
      %p41 = scmp.ne.s32.totalorder %s26, %s40
      %p42 = scmp.eq.s32.totalorder %s21, 0
      %p43 = por %p41, %p42
      %s44 = ssub.s32 %s15, %s22
      %p45 = scmp.eq.s32.totalorder %s44, 0
      %s47 = sadd.s32 %s46, 1
      %s48 = scalar_select %p45, %s46, %s47
      %p51 = pneg %p45
      %p52 = scmp.eq.s32.totalorder %s15, 1
      %p53 = por %p51, %p52
      %p54 = scmp.ne.s32.totalorder %s46, %s49
      %p55 = scmp.eq.s32.totalorder %s15, 0
      %p56 = por %p54, %p55
      %p57 = scmp.ne.s32.totalorder %s46, %s49
      %p58 = scmp.eq.s32.totalorder %s20, 1
      %p59 = por %p57, %p58
      %p60 = scmp.ne.s32.totalorder %s49, %s50
      %p61 = scmp.eq.s32.totalorder %s20, 0
      %p62 = por %p60, %p61
      %p63 = scmp.ne.s32.totalorder %s49, %s50
      %p64 = scmp.eq.s32.totalorder %s21, 1
      %p65 = por %p63, %p64
      %p67 = scmp.ne.s32.totalorder %s50, %s66
      %p68 = scmp.eq.s32.totalorder %s21, 0
      %p69 = por %p67, %p68
      %s70 = ssub.s32 %s15, %s22
      %p71 = scmp.eq.s32.totalorder %s70, 0
      %s73 = sadd.s32 %s72, 1
      %s74 = scalar_select %p71, %s72, %s73
      %p77 = pneg %p71
      %p78 = scmp.eq.s32.totalorder %s15, 1
      %p79 = por %p77, %p78
      %p80 = scmp.ne.s32.totalorder %s72, %s75
      %p81 = scmp.eq.s32.totalorder %s15, 0
      %p82 = por %p80, %p81
      %p83 = scmp.ne.s32.totalorder %s72, %s75
      %p84 = scmp.eq.s32.totalorder %s20, 1
      %p85 = por %p83, %p84
      %p86 = scmp.ne.s32.totalorder %s75, %s76
      %p87 = scmp.eq.s32.totalorder %s20, 0
      %p88 = por %p86, %p87
      %p89 = scmp.ne.s32.totalorder %s75, %s76
      %p90 = scmp.eq.s32.totalorder %s21, 1
      %p91 = por %p89, %p90
      %p93 = scmp.ne.s32.totalorder %s76, %s92
      %p94 = scmp.eq.s32.totalorder %s21, 0
      %p95 = por %p93, %p94
      %p96 = scmp.le.s32.totalorder 1, %s15
      %p97 = scmp.lt.s32.totalorder %s15, 3
      %p98 = pnand %p96, %p97
      %p99 = pneg %p98
      // Predicated region
      $region9: #{tpu_custom_call.1} parent=5 // pred_check
        _
      $region10: #{tpu_custom_call.1} parent=5 // pred_check_branch
        %101 = sbr.rel (%p98) target = $region12
      $region11: #{tpu_custom_call.1} parent=5 // pred_region
        %s102 = ssub.s32 %s15, 1
        // Predicated region
        $region13: #{tpu_custom_call.1} parent=11 // pred_check
          %p103 = pneg %p36
        $region14: #{tpu_custom_call.1} parent=11 // pred_check_branch
          %105 = sbr.rel (%p103) target = $region16
        $region15: #{tpu_custom_call.1} parent=11 // pred_region
          %s107 = ssub.s32 16, 16
          %108 = vsyncadd [#allocation5], %s107
          %111 = dma.hbm_to_smem %s0, 16, [#allocation2], [#allocation5]
        $region16: #{tpu_custom_call.1} parent=11 // pred_fallthru
          _
      $region12: #{tpu_custom_call.1} parent=5 // pred_fallthru
        _
      %p112 = scmp.lt.s32.totalorder %s15, 2
      // Predicated region
      $region17: #{tpu_custom_call.1} parent=5 // pred_check
        %p113 = pneg %p112
      $region18: #{tpu_custom_call.1} parent=5 // pred_check_branch
        %115 = sbr.rel (%p113) target = $region20
      $region19: #{tpu_custom_call.1} parent=5 // pred_region
        // Predicated region
        $region21: #{tpu_custom_call.1} parent=19 // pred_check
          %p116 = pneg %p56
        $region22: #{tpu_custom_call.1} parent=19 // pred_check_branch
          %118 = sbr.rel (%p116) target = $region24
        $region23: #{tpu_custom_call.1} parent=19 // pred_region
          %s119 = sand.u32 %s46, 1
          %s120 = scalar_lea.sflag [#allocation3], %s119
          %s121 = sand.u32 %s46, 1
          %s122 = smul.addr %s121, 6
          %s123 = scalar_lea.vmem [#allocation6], %s122
          %s125 = ssub.s32 96, 96
          %126 = vsyncadd %s120, %s125
          %s127 = smul.addr %s15, 3
          %s128 = smul.addr %s127, 32
          %s129 = scalar_lea.hbm %s1, %s128
          %s130 = sshll.u32 %s123, 4
          %s131 = int_to_ptr.vmem [resolvable:$true] %s130
          %136 = dma.hbm_to_vmem [thread:$0]  %s129, 96, %s131, %s120, 32, 32, 2
        $region24: #{tpu_custom_call.1} parent=19 // pred_fallthru
          _
      $region20: #{tpu_custom_call.1} parent=5 // pred_fallthru
        _
      %p137 = scmp.le.s32.totalorder 1, %s15
      %p138 = scmp.lt.s32.totalorder %s15, 3
      %p139 = pnand %p137, %p138
      %p140 = pneg %p139
      // Predicated region
      $region25: #{tpu_custom_call.1} parent=5 // pred_check
        _
      $region26: #{tpu_custom_call.1} parent=5 // pred_check_branch
        %142 = sbr.rel (%p139) target = $region28
      $region27: #{tpu_custom_call.1} parent=5 // pred_region
        %s143 = ssub.s32 %s15, 1
        // Predicated region
        $region29: #{tpu_custom_call.1} parent=27 // pred_check
          %p144 = pneg %p36
        $region30: #{tpu_custom_call.1} parent=27 // pred_check_branch
          %146 = sbr.rel (%p144) target = $region32
        $region31: #{tpu_custom_call.1} parent=27 // pred_region
          %147 = dma.done [#allocation5], 16
        $region32: #{tpu_custom_call.1} parent=27 // pred_fallthru
          _
        %s148 = sand.u32 %s49, 1
        %s149 = scalar_lea.sflag [#allocation3], %s148
        %s150 = sand.u32 %s49, 1
        %s151 = smul.addr %s150, 6
        %s152 = scalar_lea.vmem [#allocation6], %s151
        // Predicated region
        $region33: #{tpu_custom_call.1} parent=27 // pred_check
          %p153 = pneg %p62
        $region34: #{tpu_custom_call.1} parent=27 // pred_check_branch
          %155 = sbr.rel (%p153) target = $region36
        $region35: #{tpu_custom_call.1} parent=27 // pred_region
          %156 = dma.done %s149, 96
        $region36: #{tpu_custom_call.1} parent=27 // pred_fallthru
          _
        %157 = sfence
        %p158 = pneg %p36
        %p159 = pneg %p33
        %s160 = sand.u32 %s49, 1
        %s161 = scalar_lea.sflag [#allocation3], %s160
        %s162 = sand.u32 %s49, 1
        %s163 = smul.addr %s162, 6
        %s164 = scalar_lea.vmem [#allocation6], %s163
        %p165 = pneg %p62
        %p166 = pneg %p59
        %p167 = pneg %p88
        %p168 = pneg %p85
        %s169 = sand.u32 %s75, 1
        %s170 = scalar_lea.sflag [#allocation4], %s169
        %s171 = sand.u32 %s75, 1
        %s172 = smul.addr %s171, 6
        %s173 = scalar_lea.vmem [#allocation7], %s172
        %v174 = vld [vmem:[%s152] sm:$0x3]
        %v175 = vld [vmem:[%s152 + $0x2] sm:$0x3]
        %v176 = vld [vmem:[%s152 + $0x4] sm:$0x3]
        %s177 = sld [smem:[#allocation2 + $0x3]]
        %v178 = vmax.f32 %v174, %v175
        %v179 = vmax.f32 %v178, %v176
        %v180 = vmin.f32 %v174, %v175
        %v181 = vmin.f32 %v180, %v176
        %vm182 = vcmp.eq.f32.partialorder %v179, %v181
        %v183 = vsub.f32 %v179, %v181
        %v184 = vsel %vm182, 1.0, %v179
        %v185 = vrcp.pop %v184
        %v186 = vmul.f32 %v183, %v185
        %v187 = vsel %vm182, 1.0, %v183
        %v188 = vrcp.pop %v187
        %v189 = vsub.f32 %v179, %v174
        %v190 = vmul.f32 %v189, %v188
        %v191 = vsub.f32 %v179, %v175
        %v192 = vmul.f32 %v191, %v188
        %v193 = vsub.f32 %v179, %v176
        %v194 = vmul.f32 %v193, %v188
        %vm195 = vcmp.eq.f32.partialorder %v179, %v174
        %v196 = vsub.f32 %v194, %v192
        %v197 = vsel %vm195, %v196, 0.0
        %vm198 = vcmp.eq.f32.partialorder %v179, %v175
        %vm199 = vcmp.ne.f32.partialorder %v179, %v174
        %vm200 = vmand %vm198, %vm199
        %v201 = vadd.f32 %v190, 2.0
        %v202 = vsub.f32 %v201, %v194
        %v203 = vsel %vm200, %v202, 0.0
        %vm204 = vcmp.ne.f32.partialorder %v179, %v175
        %vm205 = vmand %vm204, %vm199
        %v206 = vadd.f32 %v192, 4.0
        %v207 = vsub.f32 %v206, %v190
        %v208 = vsel %vm205, %v207, 0.0
        %v209 = vadd.f32 %v197, %v203
        %v210 = vadd.f32 %v209, %v208
        %v211 = vrcp.pop 6.0
        %v212 = vmul.f32 %v210, %v211
        %v213 = vadd.f32 %v212, 1.0
        %v214 = vand.u32 2147483647, %v213
        %v215 = vrcp.pop 1.0
        %v216 = vmul.f32 %v214, %v215
        %v217 = vfloor.f32 %v216
        %v218 = vsub.f32 %v214, %v217
        %vm219 = vcmp.eq.f32.partialorder %v218, 1.0
        %v220 = vsel %vm219, 0.0, %v218
        %v221 = vand.u32 2147483647, %v220
        %v222 = vand.u32 %v213, 2147483648
        %v223 = vor.u32 %v221, %v222
        %vm224 = vcmp.ne.f32.partialorder %v223, 0.0
        %vm225 = vcmp.lt.f32.partialorder %v223, 0.0
        %vm226 = vmand %vm225, %vm224
        %v227 = vadd.f32 %v223, 1.0
        %v228 = vsel %vm226, %v227, %v223
        %v229 = vstv %s177
        %v230 = vadd.f32 %v228, %v229
        %v231 = vand.u32 2147483647, %v230
        %v232 = vrcp.pop 1.0
        %v233 = vmul.f32 %v231, %v232
        %v234 = vfloor.f32 %v233
        %v235 = vsub.f32 %v231, %v234
        %vm236 = vcmp.eq.f32.partialorder %v235, 1.0
        %v237 = vsel %vm236, 0.0, %v235
        %v238 = vand.u32 2147483647, %v237
        %v239 = vand.u32 %v230, 2147483648
        %v240 = vor.u32 %v238, %v239
        %vm241 = vcmp.ne.f32.partialorder %v240, 0.0
        %vm242 = vcmp.lt.f32.partialorder %v240, 0.0
        %vm243 = vmand %vm242, %vm241
        %v244 = vadd.f32 %v240, 1.0
        %v245 = vsel %vm243, %v244, %v240
        %v246 = vmul.f32 %v245, 6.0
        %v247 = vfloor.f32 %v246
        %v248 = vsub.f32 %v246, %v247
        %vm249 = vcmp.eq.f32.partialorder %v247, 6.0
        %v250 = vsel %vm249, 0.0, %v247
        %v251 = vsub.f32 1.0, %v186
        %v252 = vmul.f32 %v179, %v251
        %v253 = vmax.f32 %v252, 0.0
        %v254 = vmin.f32 %v253, 1.0
        %v255 = vmul.f32 %v186, %v248
        %v256 = vsub.f32 1.0, %v255
        %v257 = vmul.f32 %v179, %v256
        %v258 = vmax.f32 %v257, 0.0
        %v259 = vmin.f32 %v258, 1.0
        %v260 = vsub.f32 1.0, %v248
        %v261 = vmul.f32 %v186, %v260
        %v262 = vsub.f32 1.0, %v261
        %v263 = vmul.f32 %v179, %v262
        %v264 = vmax.f32 %v263, 0.0
        %v265 = vmin.f32 %v264, 1.0
        %vm266 = vcmp.eq.f32.partialorder %v250, 0.0
        %vm267 = vcmp.eq.f32.partialorder %v250, 1.0
        %vm268 = vcmp.eq.f32.partialorder %v250, 2.0
        %vm269 = vcmp.eq.f32.partialorder %v250, 3.0
        %vm270 = vcmp.eq.f32.partialorder %v250, 4.0
        %v271 = vsel %vm267, %v259, %v179
        %v272 = vsel %vm268, %v254, %v271
        %v273 = vsel %vm269, %v254, %v272
        %v274 = vsel %vm270, %v265, %v273
        %v275 = vsel %vm266, %v265, %v254
        %v276 = vsel %vm267, %v179, %v275
        %v277 = vsel %vm268, %v179, %v276
        %v278 = vsel %vm269, %v259, %v277
        %v279 = vsel %vm270, %v254, %v278
        %v280 = vsel %vm266, %v254, %v259
        %v281 = vsel %vm267, %v254, %v280
        %v282 = vsel %vm268, %v265, %v281
        %v283 = vsel %vm269, %v179, %v282
        %v284 = vsel %vm270, %v179, %v283
        %s285 = sld [smem:[#allocation2 + $0x1]]
        %v286 = vmul.f32 %v274, 0.2989
        %v287 = vmul.f32 %v279, 0.587
        %v288 = vadd.f32 %v286, %v287
        %v289 = vmul.f32 %v284, 0.114
        %v290 = vadd.f32 %v288, %v289
        %vm291 = vcmask 1041408
        %v292 = vsel %vm291, %v290, 0.0
        %293 = vadd.xlane.f32.xlu0 %v292
        %v294 = vpop.xlane.xlu0 %293
        %v295 = vrot.slane %v294, 4
        %v296 = vadd.f32 %v294, %v295
        %v297 = vrot.slane %v296, 2
        %v298 = vadd.f32 %v296, %v297
        %v299 = vrot.slane %v298, 1
        %v300 = vadd.f32 %v298, %v299
        %v301 = vrcp.pop 256.0
        %v302 = vmul.f32 %v300, %v301
        %s303 = ssub.f32 1.0, %s285
        %v304 = vstv %s303
        %v305 = vmul.f32 %v304, %v302
        %v306 = vstv %s285
        %v307 = vmul.f32 %v306, %v274
        %v308 = vadd.f32 %v307, %v305
        %v309 = vmax.f32 %v308, 0.0
        %v310 = vmin.f32 %v309, 1.0
        %v311 = vmul.f32 %v306, %v279
        %v312 = vadd.f32 %v311, %v305
        %v313 = vmax.f32 %v312, 0.0
        %v314 = vmin.f32 %v313, 1.0
        %v315 = vmul.f32 %v306, %v284
        %v316 = vadd.f32 %v315, %v305
        %v317 = vmax.f32 %v316, 0.0
        %v318 = vmin.f32 %v317, 1.0
        %s319 = sld [smem:[#allocation2]]
        %v320 = vstv %s319
        %v321 = vmul.f32 %v310, %v320
        %v322 = vmax.f32 %v321, 0.0
        %v323 = vmin.f32 %v322, 1.0
        %v324 = vmul.f32 %v314, %v320
        %v325 = vmax.f32 %v324, 0.0
        %v326 = vmin.f32 %v325, 1.0
        %v327 = vmul.f32 %v318, %v320
        %v328 = vmax.f32 %v327, 0.0
        %v329 = vmin.f32 %v328, 1.0
        %s330 = sld [smem:[#allocation2 + $0x2]]
        %v331 = vmul.f32 %v323, 0.2989
        %v332 = vmul.f32 %v326, 0.587
        %v333 = vadd.f32 %v331, %v332
        %v334 = vmul.f32 %v329, 0.114
        %v335 = vadd.f32 %v333, %v334
        %s336 = ssub.f32 1.0, %s330
        %v337 = vstv %s336
        %v338 = vmul.f32 %v337, %v335
        %v339 = vstv %s330
        %v340 = vmul.f32 %v339, %v323
        %v341 = vadd.f32 %v340, %v338
        %v342 = vmax.f32 %v341, 0.0
        %v343 = vmin.f32 %v342, 1.0
        %v344 = vmul.f32 %v339, %v326
        %v345 = vadd.f32 %v344, %v338
        %v346 = vmax.f32 %v345, 0.0
        %v347 = vmin.f32 %v346, 1.0
        %v348 = vmul.f32 %v339, %v329
        %v349 = vadd.f32 %v348, %v338
        %v350 = vmax.f32 %v349, 0.0
        %v351 = vmin.f32 %v350, 1.0
        %352 = vst [vmem:[%s173] sm:$0x3] %v343
        %353 = vst [vmem:[%s173 + $0x2] sm:$0x3] %v347
        %354 = vst [vmem:[%s173 + $0x4] sm:$0x3] %v351
        %s355 = sand.u32 %s75, 1
        %s356 = scalar_lea.sflag [#allocation4], %s355
        %s357 = sand.u32 %s75, 1
        %s358 = smul.addr %s357, 6
        %s359 = scalar_lea.vmem [#allocation7], %s358
        // Predicated region
        $region37: #{tpu_custom_call.1} parent=27 // pred_check
          %p360 = pneg %p85
        $region38: #{tpu_custom_call.1} parent=27 // pred_check_branch
          %362 = sbr.rel (%p360) target = $region40
        $region39: #{tpu_custom_call.1} parent=27 // pred_region
          %s364 = ssub.s32 96, 96
          %365 = vsyncadd %s356, %s364
          %s366 = smul.addr %s20, 3
          %s367 = smul.addr %s366, 32
          %s368 = scalar_lea.hbm %s2, %s367
          %s369 = sshll.u32 %s359, 4
          %s370 = int_to_ptr.vmem [resolvable:$true] %s369
          %375 = dma.vmem_to_hbm [thread:$0]  %s370, 96, %s368, %s356, 32, 32, 2
        $region40: #{tpu_custom_call.1} parent=27 // pred_fallthru
          _
      $region28: #{tpu_custom_call.1} parent=5 // pred_fallthru
        _
      %p376 = scmp.le.s32.totalorder 2, %s15
      // Predicated region
      $region41: #{tpu_custom_call.1} parent=5 // pred_check
        %p377 = pneg %p376
      $region42: #{tpu_custom_call.1} parent=5 // pred_check_branch
        %379 = sbr.rel (%p377) target = $region44
      $region43: #{tpu_custom_call.1} parent=5 // pred_region
        %s380 = ssub.s32 %s15, 2
        // Predicated region
        $region45: #{tpu_custom_call.1} parent=43 // pred_check
          %p381 = pneg %p91
        $region46: #{tpu_custom_call.1} parent=43 // pred_check_branch
          %383 = sbr.rel (%p381) target = $region48
        $region47: #{tpu_custom_call.1} parent=43 // pred_region
          %s384 = sand.u32 %s76, 1
          %s385 = scalar_lea.sflag [#allocation4], %s384
          %s386 = sand.u32 %s76, 1
          %s387 = smul.addr %s386, 6
          %s388 = scalar_lea.vmem [#allocation7], %s387
          %389 = dma.done %s385, 96
        $region48: #{tpu_custom_call.1} parent=43 // pred_fallthru
          _
      $region44: #{tpu_custom_call.1} parent=5 // pred_fallthru
        _
    $region6: #{tpu_custom_call.1} parent=1 // loop_footer
      %s19 = sadd.s32 1, %s15
    $region7: #{tpu_custom_call.1} parent=1 // loop_footer_branch
      %14 = sbr.rel target = $region3
    $region8: #{tpu_custom_call.1} parent=1 // loop_exit
      _
    %390 = vsyncpa [#allocation3], 1
    %s391 = scalar_lea.sflag [#allocation3], 1
    %392 = vsyncpa %s391, 1
    %393 = vsyncpa [#allocation4], 1
    %s394 = scalar_lea.sflag [#allocation4], 1
    %395 = vsyncpa %s394, 1
    %396 = vsyncpa [#allocation5], 1
    %s397 = scalar_lea.sflag [#allocation5], 1
    %398 = vsyncpa %s397, 1

</llo_original>
